<compile_context>
chip_gen: v5e
topology: v5e:2x2
jax: 0.10.0
libtpu: 0.0.40
codegen_flags: <defaults>
</compile_context>

<pallas_src>
import jax
import jax.numpy as jnp
from jax.experimental import pallas as pl
from jax.experimental.pallas import tpu as pltpu

EPS = 1e-5
LANE = 128


def _round_up(n, m):
    return ((n + m - 1) // m) * m


def _bn_train(h, gamma, beta):
    """Training-mode BatchNorm1d (biased batch variance), per feature column.

    Two-pass form: var = mean((h - mean)^2); avoids E[h^2]-mean^2 cancellation."""
    inv_n = 1.0 / h.shape[0]
    mean = jnp.sum(h, axis=0, keepdims=True) * inv_n
    d = h - mean
    var = jnp.sum(d * d, axis=0, keepdims=True) * inv_n
    return d * jax.lax.rsqrt(var + EPS) * gamma + beta


def classifier_kernel(x_ref, wcat_ref, wf_ref, bn_ref, o_ref):
    wp = wcat_ref.shape[1]     # packed branch width (multiple of 128)
    op = wf_ref.shape[1]       # padded output width (multiple of 128)

    # Fused first layer: ONE MXU push.  W_cat packs lin1 into columns [:inter]
    # and lin2 into columns [inter:2*inter] of the same 128-lane slab.
    h = jnp.dot(x_ref[...], wcat_ref[...], preferred_element_type=jnp.float32)

    # BN1 | BN2 as a single per-column batch-norm over the packed feature axis
    # (identical math: BN statistics are per column).
    hbn = _bn_train(h, bn_ref[0:1, :wp], bn_ref[1:2, :wp])

    # Polynome_ACT (0.47 + 0.5*x + 0.09*x**2) on branch-1 columns only, via a
    # 0/1 mask column; inter <= 160 so the [:, :160] slice covers every
    # branch-1 feature.  Zero-padded columns stay 0 and hit zero rows of wf.
    mask = bn_ref[2:3, :wp]
    p = hbn + mask * (0.47 - 0.5 * hbn + 0.09 * hbn * hbn)

    # linvf(concat(poly(x1), x2)) as one MXU push against the packed Wf.
    # linvf's bias is dropped: an additive per-feature constant is exactly
    # cancelled by BNvf's batch-mean subtraction (training mode).
    hf = jnp.dot(p.astype(wf_ref.dtype), wf_ref[...],
                 preferred_element_type=jnp.float32)

    # BNvf; lane-dense (B, Op) store, real columns sliced outside.
    o_ref[...] = _bn_train(hf, bn_ref[3:4, :op], bn_ref[4:5, :op])


def make_classifier(params, *, fcsize, non_lin, inter, out_planes,
                    matmul_dtype=jnp.bfloat16):
    """Packs / pads the weights ONCE and returns a jitted forward(x) callable."""
    d2 = fcsize - non_lin
    # Polynome_ACT squares only the first 160 features; the elementwise rewrite
    # is exact only when inter <= 160.
    assert inter <= 160, "Polynome_ACT slice [:, :160] must cover all `inter` features"
    assert params["w1"].shape == (non_lin, inter)
    assert params["w2"].shape == (d2, inter)

    Kp = _round_up(fcsize, LANE)          # lane-dense contraction width
    Wp = _round_up(2 * inter, LANE)       # both branches packed into one slab
    Op = _round_up(out_planes, LANE)      # lane-dense output width
    W = max(Wp, Op)
    f32 = jnp.float32

    # ---- fused + packed first-layer weight (Kp, Wp): branch 1 -> columns
    # [:inter], branch 2 -> columns [inter:2*inter] ---------------------------
    wcat = jnp.zeros((Kp, Wp), f32)
    wcat = wcat.at[:non_lin, :inter].set(params["w1"])
    wcat = wcat.at[non_lin:fcsize, inter:2 * inter].set(params["w2"])

    # ---- fused final weight (Wp, Op), rows matching the packed layout -------
    wf = jnp.zeros((Wp, Op), f32)
    wf = wf.at[:inter, :out_planes].set(params["wf1"])
    wf = wf.at[inter:2 * inter, :out_planes].set(params["wf2"])

    # ---- ONE small BN/mask slab (5, W): gamma12|beta12|poly-mask|gammaf|betaf
    bn = jnp.zeros((5, W), f32)
    bn = bn.at[0, :inter].set(params["g1"])
    bn = bn.at[0, inter:2 * inter].set(params["g2"])
    bn = bn.at[1, :inter].set(params["b1"])
    bn = bn.at[1, inter:2 * inter].set(params["b2"])
    bn = bn.at[2, :inter].set(1.0)                 # poly mask: branch-1 columns only
    bn = bn.at[3, :out_planes].set(params["gf"])
    bn = bn.at[4, :out_planes].set(params["bff"])

    wcat = wcat.astype(matmul_dtype)
    wf = wf.astype(matmul_dtype)

    # Generation-aware VMEM cap (v5e/v6e: 128 MiB physical, v7x: 64 MiB).
    try:
        vmem_phys = int(pltpu.get_tpu_info().vmem_capacity_bytes)
    except Exception:
        vmem_phys = 64 << 20
    vmem_cap = (vmem_phys * 3) // 4

    vspec = pl.BlockSpec(memory_space=pltpu.MemorySpace.VMEM)

    def forward(x):
        B, fc = x.shape
        assert fc == fcsize, "feature width mismatch with packed weights"
        xp = x if Kp == fc else jnp.pad(x, ((0, 0), (0, Kp - fc)))
        xp = xp.astype(matmul_dtype)

        in_bytes = (xp.size * xp.dtype.itemsize
                    + wcat.size * wcat.dtype.itemsize
                    + wf.size * wf.dtype.itemsize
                    + bn.size * bn.dtype.itemsize)
        out_bytes = B * Op * 4
        flops = 2 * B * (Kp * Wp + Wp * Op) + 24 * B * (Wp + Op)
        cost = pl.CostEstimate(flops=flops, transcendentals=0,
                               bytes_accessed=in_bytes + out_bytes)

        # Single-block residency: x, h/hbn/p (B, Wp) f32, hf/out (B, Op) f32.
        need = in_bytes + out_bytes + 4 * B * (2 * Wp + Op)
        vmem_limit = int(min(max(4 * need, 4 << 20), vmem_cap))
        # TODO(synk): for large B (single block no longer fits VMEM / uses one
        # TC only), add a batch grid with a two-pass BN (pass 1: matmul1 +
        # per-feature sum & sum-of-squares accumulation over an "arbitrary"
        # axis; pass 2: normalize + poly + matmul2 + BNvf), batch axis
        # "parallel" for megacore.  Do NOT zero-pad the batch dimension — BN
        # statistics must use the true row count.
        assert need <= vmem_cap, "batch too large for the single-block kernel"

        out_padded = pl.pallas_call(
            classifier_kernel,
            out_shape=jax.ShapeDtypeStruct((B, Op), jnp.float32),
            in_specs=[vspec, vspec, vspec, vspec],
            out_specs=vspec,
            cost_estimate=cost,
            compiler_params=pltpu.CompilerParams(vmem_limit_bytes=vmem_limit),
        )(xp, wcat, wf, bn)
        return out_padded[:, :out_planes]

    return jax.jit(forward)


def init_params(key, *, fcsize, non_lin, inter, out_planes):
    """Deterministic synthetic parameters matching the module's __init__ shapes.

    Linear weights are stored pre-transposed as (in_features, out_features).
    The linvf bias is intentionally omitted: added before a training-mode
    BatchNorm it is exactly cancelled by the batch-mean subtraction."""
    d2 = fcsize - non_lin
    ks = jax.random.split(key, 9)

    def lin_w(k, fan_in, fan_out):
        bound = 1.0 / jnp.sqrt(fan_in)
        return jax.random.uniform(k, (fan_in, fan_out), jnp.float32, -bound, bound)

    wf_full = lin_w(ks[2], 2 * inter, out_planes)        # linvf weight (2*inter, out)
    return {
        "w1": lin_w(ks[0], non_lin, inter),              # lin1 (no bias)
        "w2": lin_w(ks[1], d2, inter),                   # lin2 (no bias)
        "wf1": wf_full[:inter, :],                       # linvf split for concat
        "wf2": wf_full[inter:, :],
        "g1": 1.0 + 0.1 * jax.random.normal(ks[3], (inter,), jnp.float32),
        "b1": 0.1 * jax.random.normal(ks[4], (inter,), jnp.float32),
        "g2": 1.0 + 0.1 * jax.random.normal(ks[5], (inter,), jnp.float32),
        "b2": 0.1 * jax.random.normal(ks[6], (inter,), jnp.float32),
        "gf": 1.0 + 0.1 * jax.random.normal(ks[7], (out_planes,), jnp.float32),
        "bff": 0.1 * jax.random.normal(ks[8], (out_planes,), jnp.float32),
    }


def _reference(x, params, *, non_lin):
    """Pure-JAX mirror of the PyTorch forward (training-mode BN, bias dropped)."""
    def bn(h, g, b):
        m = jnp.mean(h, axis=0, keepdims=True)
        v = jnp.mean((h - m) ** 2, axis=0, keepdims=True)
        return (h - m) * jax.lax.rsqrt(v + EPS) * g + b

    x1 = x[:, :non_lin]
    x2 = x[:, non_lin:]
    h1 = bn(x1 @ params["w1"], params["g1"], params["b1"])
    h2 = bn(x2 @ params["w2"], params["g2"], params["b2"])
    p1 = 0.47 + 0.5 * h1 + 0.09 * h1[:, :160] ** 2
    hf = p1 @ params["wf1"] + h2 @ params["wf2"]
    return bn(hf, params["gf"], params["bff"])


if __name__ == "__main__":
    # Small shapes consistent with the module: fcsize > non_lin, inter <= 160.
    B, fcsize, non_lin, inter, out_planes = 8, 128, 96, 16, 10

    key = jax.random.PRNGKey(0)
    kx, kp = jax.random.split(key)
    x = jax.random.normal(kx, (B, fcsize), jnp.float32)
    params = init_params(kp, fcsize=fcsize, non_lin=non_lin,
                         inter=inter, out_planes=out_planes)

    # Sanity check of the fused/packed rewrite in f32 against a pure-JAX ref.
    fwd_f32 = make_classifier(params, fcsize=fcsize, non_lin=non_lin,
                              inter=inter, out_planes=out_planes,
                              matmul_dtype=jnp.float32)
    out_f32 = fwd_f32(x)
    ref = _reference(x, params, non_lin=non_lin)
    max_err = float(jnp.max(jnp.abs(out_f32 - ref)))
    assert max_err < 5e-2, f"mismatch vs reference: {max_err}"

    # Optimized path: packed weights built once, bf16 matmul operands,
    # f32 accumulation / BN / polynomial.  Repeated calls reuse the packed
    # weights and the compiled executable.
    fwd = make_classifier(params, fcsize=fcsize, non_lin=non_lin,
                          inter=inter, out_planes=out_planes)
    out = fwd(x)
    jax.block_until_ready(out)
    out = fwd(x)                     # second call: no repacking, cached jit
    jax.block_until_ready(out)

    assert out.shape == (B, out_planes) and out.dtype == jnp.float32
    assert bool(jnp.all(jnp.isfinite(out)))
    print("KERNEL_OK")
</pallas_src>

<mosaic_0001>
module attributes {stable_mosaic.version = 11 : i64} {
  func.func @classifier_kernel(%arg0: memref<8x128xf32, #tpu.memory_space<vmem>>, %arg1: memref<128x128xf32, #tpu.memory_space<vmem>>, %arg2: memref<128x128xf32, #tpu.memory_space<vmem>>, %arg3: memref<5x128xf32, #tpu.memory_space<vmem>>, %arg4: memref<8x128xf32, #tpu.memory_space<vmem>>) attributes {dimension_semantics = [], scalar_prefetch = 0 : i64, scratch_operands = 0 : i64, tpu.core_type = #tpu.core_type<tc>} {
    %c0 = arith.constant 0 : index
    %c0_0 = arith.constant 0 : index
    %0 = vector.load %arg0[%c0, %c0_0] : memref<8x128xf32, #tpu.memory_space<vmem>>, vector<8x128xf32>
    %c0_1 = arith.constant 0 : index
    %c0_2 = arith.constant 0 : index
    %1 = vector.load %arg1[%c0_1, %c0_2] : memref<128x128xf32, #tpu.memory_space<vmem>>, vector<128x128xf32>
    %cst = arith.constant dense<0.000000e+00> : vector<8x128xf32>
    %2 = tpu.matmul %0, %1, %cst {dimension_numbers = #tpu.dot_dimension_numbers<[1], [0], [0], [1], [0, 0, 1, 1], [], []>} : vector<8x128xf32>, vector<128x128xf32>, vector<8x128xf32> -> vector<8x128xf32>
    %c0_3 = arith.constant 0 : index
    %c0_4 = arith.constant 0 : index
    %3 = vector.load %arg3[%c0_3, %c0_4] : memref<5x128xf32, #tpu.memory_space<vmem>>, vector<1x128xf32>
    %c1 = arith.constant 1 : index
    %c0_5 = arith.constant 0 : index
    %4 = vector.load %arg3[%c1, %c0_5] : memref<5x128xf32, #tpu.memory_space<vmem>>, vector<1x128xf32>
    %cst_6 = arith.constant dense<0.000000e+00> : vector<128xf32>
    %5 = vector.multi_reduction <add>, %2, %cst_6 [0] : vector<8x128xf32> to vector<128xf32>
    %6 = vector.shape_cast %5 : vector<128xf32> to vector<1x128xf32>
    %cst_7 = arith.constant 1.250000e-01 : f32
    %7 = vector.broadcast %cst_7 : f32 to vector<1x128xf32>
    %8 = arith.mulf %6, %7 : vector<1x128xf32>
    %9 = vector.broadcast %8 : vector<1x128xf32> to vector<8x128xf32>
    %10 = arith.subf %2, %9 : vector<8x128xf32>
    %11 = arith.mulf %10, %10 : vector<8x128xf32>
    %cst_8 = arith.constant dense<0.000000e+00> : vector<128xf32>
    %12 = vector.multi_reduction <add>, %11, %cst_8 [0] : vector<8x128xf32> to vector<128xf32>
    %13 = vector.shape_cast %12 : vector<128xf32> to vector<1x128xf32>
    %cst_9 = arith.constant 1.250000e-01 : f32
    %14 = vector.broadcast %cst_9 : f32 to vector<1x128xf32>
    %15 = arith.mulf %13, %14 : vector<1x128xf32>
    %cst_10 = arith.constant 9.99999974E-6 : f32
    %16 = vector.broadcast %cst_10 : f32 to vector<1x128xf32>
    %17 = arith.addf %15, %16 : vector<1x128xf32>
    %18 = math.rsqrt %17 : vector<1x128xf32>
    %19 = vector.broadcast %18 : vector<1x128xf32> to vector<8x128xf32>
    %20 = arith.mulf %10, %19 : vector<8x128xf32>
    %21 = vector.broadcast %3 : vector<1x128xf32> to vector<8x128xf32>
    %22 = arith.mulf %20, %21 : vector<8x128xf32>
    %23 = vector.broadcast %4 : vector<1x128xf32> to vector<8x128xf32>
    %24 = arith.addf %22, %23 : vector<8x128xf32>
    %c2 = arith.constant 2 : index
    %c0_11 = arith.constant 0 : index
    %25 = vector.load %arg3[%c2, %c0_11] : memref<5x128xf32, #tpu.memory_space<vmem>>, vector<1x128xf32>
    %cst_12 = arith.constant 5.000000e-01 : f32
    %26 = vector.broadcast %cst_12 : f32 to vector<8x128xf32>
    %27 = arith.mulf %26, %24 : vector<8x128xf32>
    %cst_13 = arith.constant 4.700000e-01 : f32
    %28 = vector.broadcast %cst_13 : f32 to vector<8x128xf32>
    %29 = arith.subf %28, %27 : vector<8x128xf32>
    %cst_14 = arith.constant 9.000000e-02 : f32
    %30 = vector.broadcast %cst_14 : f32 to vector<8x128xf32>
    %31 = arith.mulf %30, %24 : vector<8x128xf32>
    %32 = arith.mulf %31, %24 : vector<8x128xf32>
    %33 = arith.addf %29, %32 : vector<8x128xf32>
    %34 = vector.broadcast %25 : vector<1x128xf32> to vector<8x128xf32>
    %35 = arith.mulf %34, %33 : vector<8x128xf32>
    %36 = arith.addf %24, %35 : vector<8x128xf32>
    %c0_15 = arith.constant 0 : index
    %c0_16 = arith.constant 0 : index
    %37 = vector.load %arg2[%c0_15, %c0_16] : memref<128x128xf32, #tpu.memory_space<vmem>>, vector<128x128xf32>
    %cst_17 = arith.constant dense<0.000000e+00> : vector<8x128xf32>
    %38 = tpu.matmul %36, %37, %cst_17 {dimension_numbers = #tpu.dot_dimension_numbers<[1], [0], [0], [1], [0, 0, 1, 1], [], []>} : vector<8x128xf32>, vector<128x128xf32>, vector<8x128xf32> -> vector<8x128xf32>
    %c3 = arith.constant 3 : index
    %c0_18 = arith.constant 0 : index
    %39 = vector.load %arg3[%c3, %c0_18] : memref<5x128xf32, #tpu.memory_space<vmem>>, vector<1x128xf32>
    %c4 = arith.constant 4 : index
    %c0_19 = arith.constant 0 : index
    %40 = vector.load %arg3[%c4, %c0_19] : memref<5x128xf32, #tpu.memory_space<vmem>>, vector<1x128xf32>
    %cst_20 = arith.constant dense<0.000000e+00> : vector<128xf32>
    %41 = vector.multi_reduction <add>, %38, %cst_20 [0] : vector<8x128xf32> to vector<128xf32>
    %42 = vector.shape_cast %41 : vector<128xf32> to vector<1x128xf32>
    %cst_21 = arith.constant 1.250000e-01 : f32
    %43 = vector.broadcast %cst_21 : f32 to vector<1x128xf32>
    %44 = arith.mulf %42, %43 : vector<1x128xf32>
    %45 = vector.broadcast %44 : vector<1x128xf32> to vector<8x128xf32>
    %46 = arith.subf %38, %45 : vector<8x128xf32>
    %47 = arith.mulf %46, %46 : vector<8x128xf32>
    %cst_22 = arith.constant dense<0.000000e+00> : vector<128xf32>
    %48 = vector.multi_reduction <add>, %47, %cst_22 [0] : vector<8x128xf32> to vector<128xf32>
    %49 = vector.shape_cast %48 : vector<128xf32> to vector<1x128xf32>
    %cst_23 = arith.constant 1.250000e-01 : f32
    %50 = vector.broadcast %cst_23 : f32 to vector<1x128xf32>
    %51 = arith.mulf %49, %50 : vector<1x128xf32>
    %cst_24 = arith.constant 9.99999974E-6 : f32
    %52 = vector.broadcast %cst_24 : f32 to vector<1x128xf32>
    %53 = arith.addf %51, %52 : vector<1x128xf32>
    %54 = math.rsqrt %53 : vector<1x128xf32>
    %55 = vector.broadcast %54 : vector<1x128xf32> to vector<8x128xf32>
    %56 = arith.mulf %46, %55 : vector<8x128xf32>
    %57 = vector.broadcast %39 : vector<1x128xf32> to vector<8x128xf32>
    %58 = arith.mulf %56, %57 : vector<8x128xf32>
    %59 = vector.broadcast %40 : vector<1x128xf32> to vector<8x128xf32>
    %60 = arith.addf %58, %59 : vector<8x128xf32>
    %c0_25 = arith.constant 0 : index
    %c0_26 = arith.constant 0 : index
    %61 = vector.load %arg4[%c0_25, %c0_26] : memref<8x128xf32, #tpu.memory_space<vmem>>, vector<8x128xf32>
    tpu.vector_store %arg4[%c0_25, %c0_26], %60 {strides = array<i32>} : memref<8x128xf32, #tpu.memory_space<vmem>>, vector<8x128xf32>,
    return
  }
}

</mosaic_0001>

<llo_original>
// kernel: forward.1
$region0: #{forward.1}
  #allocation0 [shape = 'u32[]', space=smem, size = 0x4, offset = 0x4, fixed_abs, tag = 'smem constant byte address 0x4 - core index']
  #allocation1 [shape = 'u32[72,128]{1,0:T(1,128)}', space=vmem, size = 0x9000, scoped, tag = 'internal scratch']
  %s0 = inlined_call_operand.hbm [shape: f32[8,128], index: 0, kind: input, shape index: {}]
  %s1 = inlined_call_operand.hbm [shape: f32[128,128], index: 1, kind: input, shape index: {}]
  %s2 = inlined_call_operand.hbm [shape: f32[128,128], index: 2, kind: input, shape index: {}]
  %s3 = inlined_call_operand.hbm [shape: f32[5,128], index: 3, kind: input, shape index: {}]
  %s4 = inlined_call_operand.hbm [shape: f32[8,128], index: 4, kind: output, shape index: {}]
  %s5 = sld [smem:[#allocation0]]
  $region42: #{forward.1} parent=0
    _
  %s7 = ssub.s32 1, %s5
  %s8 = scalar_select 0, %s7, %s5
  $region1: #{forward.1} parent=0
    #allocation2 [shape = 'u8[4096]{0}', space=vmem, size = 0x1000, scoped, tag = 'input window, operand 0, single buffered']
    #allocation3 [shape = 's32[1]{0}', space=sflag, size = 0x4, scoped, tag = 'scoped memory for forward.1']
    #allocation4 [shape = 's32[1]{0}', space=sflag, size = 0x4, scoped, tag = 'scoped memory for forward.1']
    #allocation5 [shape = 'u8[65536]{0}', space=vmem, size = 0x10000, scoped, tag = 'input window, operand 1, single buffered']
    #allocation6 [shape = 's32[1]{0}', space=sflag, size = 0x4, scoped, tag = 'scoped memory for forward.1']
    #allocation7 [shape = 'u8[65536]{0}', space=vmem, size = 0x10000, scoped, tag = 'input window, operand 2, single buffered']
    #allocation8 [shape = 'u8[4096]{0}', space=vmem, size = 0x1000, scoped, tag = 'input window, operand 3, single buffered']
    #allocation9 [shape = 's32[1]{0}', space=sflag, size = 0x4, scoped, tag = 'scoped memory for forward.1']
    #allocation10 [shape = 'u8[4096]{0}', space=vmem, size = 0x1000, scoped, tag = 'output window, operand 0, single buffered']
    %9 = vsyncpa [#allocation3], 0
    %10 = vsyncpa [#allocation6], 0
    %11 = vsyncpa [#allocation9], 0
    %12 = vsyncpa [#allocation4], 0
    // Predicated region
    $region2: #{forward.1} parent=1 // pred_check
      _
    $region3: #{forward.1} parent=1 // pred_check_branch
      %14 = sbr.rel (0) target = $region5
    $region4: #{forward.1} parent=1 // pred_region
      %16 = vsyncadd [#allocation3], 0
      %s18 = sshll.u32 %s0, 4
      %s19 = int_to_ptr.hbm [resolvable:$true] %s18
      %s20 = sshll.u32 [#allocation2], 4
      %s21 = int_to_ptr.vmem [resolvable:$true] %s20
      %23 = dma.hbm_to_vmem [thread:$0]  %s19, 128, %s21, [#allocation3]
    $region5: #{forward.1} parent=1 // pred_fallthru
      _
    // Predicated region
    $region6: #{forward.1} parent=1 // pred_check
      _
    $region7: #{forward.1} parent=1 // pred_check_branch
      %25 = sbr.rel (0) target = $region9
    $region8: #{forward.1} parent=1 // pred_region
      %27 = vsyncadd [#allocation6], 0
      %s28 = sshll.u32 %s1, 4
      %s29 = int_to_ptr.hbm [resolvable:$true] %s28
      %s30 = sshll.u32 [#allocation5], 4
      %s31 = int_to_ptr.vmem [resolvable:$true] %s30
      %36 = dma.hbm_to_vmem [thread:$0]  %s29, 2048, %s31, [#allocation6], 128, 128, 8
    $region9: #{forward.1} parent=1 // pred_fallthru
      _
    // Predicated region
    $region10: #{forward.1} parent=1 // pred_check
      _
    $region11: #{forward.1} parent=1 // pred_check_branch
      %38 = sbr.rel (0) target = $region13
    $region12: #{forward.1} parent=1 // pred_region
      %40 = vsyncadd [#allocation6], 0
      %s41 = sshll.u32 %s2, 4
      %s42 = int_to_ptr.hbm [resolvable:$true] %s41
      %s43 = sshll.u32 [#allocation7], 4
      %s44 = int_to_ptr.vmem [resolvable:$true] %s43
      %49 = dma.hbm_to_vmem [thread:$0]  %s42, 2048, %s44, [#allocation6], 128, 128, 8
    $region13: #{forward.1} parent=1 // pred_fallthru
      _
    // Predicated region
    $region14: #{forward.1} parent=1 // pred_check
      _
    $region15: #{forward.1} parent=1 // pred_check_branch
      %51 = sbr.rel (0) target = $region17
    $region16: #{forward.1} parent=1 // pred_region
      %53 = vsyncadd [#allocation9], 0
      %s55 = sshll.u32 %s3, 4
      %s56 = int_to_ptr.hbm [resolvable:$true] %s55
      %s57 = sshll.u32 [#allocation8], 4
      %s58 = int_to_ptr.vmem [resolvable:$true] %s57
      %60 = dma.hbm_to_vmem [thread:$0]  %s56, 128, %s58, [#allocation9]
    $region17: #{forward.1} parent=1 // pred_fallthru
      _
    // Predicated region
    $region18: #{forward.1} parent=1 // pred_check
      _
    $region19: #{forward.1} parent=1 // pred_check_branch
      %62 = sbr.rel (0) target = $region21
    $region20: #{forward.1} parent=1 // pred_region
      %64 = dma.done [#allocation3], 128
    $region21: #{forward.1} parent=1 // pred_fallthru
      _
    // Predicated region
    $region22: #{forward.1} parent=1 // pred_check
      _
    $region23: #{forward.1} parent=1 // pred_check_branch
      %66 = sbr.rel (0) target = $region25
    $region24: #{forward.1} parent=1 // pred_region
      %68 = dma.done [#allocation6], 2048
    $region25: #{forward.1} parent=1 // pred_fallthru
      _
    // Predicated region
    $region26: #{forward.1} parent=1 // pred_check
      _
    $region27: #{forward.1} parent=1 // pred_check_branch
      %70 = sbr.rel (0) target = $region29
    $region28: #{forward.1} parent=1 // pred_region
      %72 = dma.done [#allocation6], 2048
    $region29: #{forward.1} parent=1 // pred_fallthru
      _
    // Predicated region
    $region30: #{forward.1} parent=1 // pred_check
      _
    $region31: #{forward.1} parent=1 // pred_check_branch
      %74 = sbr.rel (0) target = $region33
    $region32: #{forward.1} parent=1 // pred_region
      %76 = dma.done [#allocation9], 128
    $region33: #{forward.1} parent=1 // pred_fallthru
      _
    %v77 = vld [vmem:[#allocation2] sm:$0xff]
    %v78 = vld [vmem:[#allocation5] sm:$0xff]
    %v79 = vld [vmem:[#allocation5 + $0x8] sm:$0xff]
    %v80 = vld [vmem:[#allocation5 + $0x10] sm:$0xff]
    %v81 = vld [vmem:[#allocation5 + $0x18] sm:$0xff]
    %v82 = vld [vmem:[#allocation5 + $0x20] sm:$0xff]
    %v83 = vld [vmem:[#allocation5 + $0x28] sm:$0xff]
    %v84 = vld [vmem:[#allocation5 + $0x30] sm:$0xff]
    %v85 = vld [vmem:[#allocation5 + $0x38] sm:$0xff]
    %v86 = vld [vmem:[#allocation5 + $0x40] sm:$0xff]
    %v87 = vld [vmem:[#allocation5 + $0x48] sm:$0xff]
    %v88 = vld [vmem:[#allocation5 + $0x50] sm:$0xff]
    %v89 = vld [vmem:[#allocation5 + $0x58] sm:$0xff]
    %v90 = vld [vmem:[#allocation5 + $0x60] sm:$0xff]
    %v91 = vld [vmem:[#allocation5 + $0x68] sm:$0xff]
    %v92 = vld [vmem:[#allocation5 + $0x70] sm:$0xff]
    %v93 = vld [vmem:[#allocation5 + $0x78] sm:$0xff]
    %94 = vmatpush.msra.mxu0 %v93
    %95 = vmatpush.msra.mxu0 %v92
    %96 = vmatpush.msra.mxu0 %v91
    %97 = vmatpush.msra.mxu0 %v90
    %98 = vmatpush.msra.mxu0 %v89
    %99 = vmatpush.msra.mxu0 %v88
    %100 = vmatpush.msra.mxu0 %v87
    %101 = vmatpush.msra.mxu0 %v86
    %102 = vmatpush.msra.mxu0 %v85
    %103 = vmatpush.msra.mxu0 %v84
    %104 = vmatpush.msra.mxu0 %v83
    %105 = vmatpush.msra.mxu0 %v82
    %106 = vmatpush.msra.mxu0 %v81
    %107 = vmatpush.msra.mxu0 %v80
    %108 = vmatpush.msra.mxu0 %v79
    %109 = vmatpush.msra.mxu0 %v78
    %110 = vmatmul.f32.gmra.mxu0 %v77
    %v111 = vpop.f32.mrf.mxu0
    %v112 = vadd.f32 0.0, %v111
    %113 = vdwg.mxu0
    %v114 = vld [vmem:[#allocation8] sm:$0x1]
    %v115 = vld [vmem:[#allocation8 + $0x1] sm:$0x1]
    %v116 = vrot.slane %v112, 4
    %v117 = vadd.f32 %v112, %v116
    %v118 = vrot.slane %v117, 2
    %v119 = vadd.f32 %v117, %v118
    %v120 = vrot.slane %v119, 1
    %v121 = vadd.f32 %v119, %v120
    %v122 = vmul.f32 %v121, 0.125
    %v123 = vsub.f32 %v112, %v122
    %v124 = vmul.f32 %v123, %v123
    %v125 = vrot.slane %v124, 4
    %v126 = vadd.f32 %v124, %v125
    %v127 = vrot.slane %v126, 2
    %v128 = vadd.f32 %v126, %v127
    %v129 = vrot.slane %v128, 1
    %v130 = vadd.f32 %v128, %v129
    %v131 = vmul.f32 %v130, 0.125
    %v132 = vadd.f32 %v131, 1e-05
    %v133 = vrsqrt.pop %v132
    %v134 = vmul.f32 %v133, %v132
    %v135 = vmul.f32 %v134, %v133
    %v136 = vmul.f32 0.5, %v135
    %v137 = vsub.f32 1.5, %v136
    %v138 = vmul.f32 %v133, %v137
    %vm139 = vweird.f32 %v132
    %vm140 = vweird.f32 %v133
    %vm141 = vmor %vm139, %vm140
    %v142 = vsel %vm141, %v133, %v138
    %v143 = vmul.f32 %v123, %v142
    %v144 = vperm.slane %v114, 0
    %v145 = vmul.f32 %v143, %v144
    %v146 = vperm.slane %v115, 0
    %v147 = vadd.f32 %v145, %v146
    %v148 = vld [vmem:[#allocation8 + $0x2] sm:$0x1]
    %v149 = vmul.f32 %v147, 0.5
    %v150 = vsub.f32 0.47, %v149
    %v151 = vmul.f32 %v147, 0.09
    %v152 = vmul.f32 %v151, %v147
    %v153 = vadd.f32 %v150, %v152
    %v154 = vperm.slane %v148, 0
    %v155 = vmul.f32 %v154, %v153
    %v156 = vadd.f32 %v147, %v155
    %v157 = vld [vmem:[#allocation7] sm:$0xff]
    %v158 = vld [vmem:[#allocation7 + $0x8] sm:$0xff]
    %v159 = vld [vmem:[#allocation7 + $0x10] sm:$0xff]
    %v160 = vld [vmem:[#allocation7 + $0x18] sm:$0xff]
    %v161 = vld [vmem:[#allocation7 + $0x20] sm:$0xff]
    %v162 = vld [vmem:[#allocation7 + $0x28] sm:$0xff]
    %v163 = vld [vmem:[#allocation7 + $0x30] sm:$0xff]
    %v164 = vld [vmem:[#allocation7 + $0x38] sm:$0xff]
    %v165 = vld [vmem:[#allocation7 + $0x40] sm:$0xff]
    %v166 = vld [vmem:[#allocation7 + $0x48] sm:$0xff]
    %v167 = vld [vmem:[#allocation7 + $0x50] sm:$0xff]
    %v168 = vld [vmem:[#allocation7 + $0x58] sm:$0xff]
    %v169 = vld [vmem:[#allocation7 + $0x60] sm:$0xff]
    %v170 = vld [vmem:[#allocation7 + $0x68] sm:$0xff]
    %v171 = vld [vmem:[#allocation7 + $0x70] sm:$0xff]
    %v172 = vld [vmem:[#allocation7 + $0x78] sm:$0xff]
    %173 = vmatpush.msra.mxu0 %v172
    %174 = vmatpush.msra.mxu0 %v171
    %175 = vmatpush.msra.mxu0 %v170
    %176 = vmatpush.msra.mxu0 %v169
    %177 = vmatpush.msra.mxu0 %v168
    %178 = vmatpush.msra.mxu0 %v167
    %179 = vmatpush.msra.mxu0 %v166
    %180 = vmatpush.msra.mxu0 %v165
    %181 = vmatpush.msra.mxu0 %v164
    %182 = vmatpush.msra.mxu0 %v163
    %183 = vmatpush.msra.mxu0 %v162
    %184 = vmatpush.msra.mxu0 %v161
    %185 = vmatpush.msra.mxu0 %v160
    %186 = vmatpush.msra.mxu0 %v159
    %187 = vmatpush.msra.mxu0 %v158
    %188 = vmatpush.msra.mxu0 %v157
    %189 = vmatmul.f32.gmra.mxu0 %v156
    %v190 = vpop.f32.mrf.mxu0
    %v191 = vadd.f32 0.0, %v190
    %192 = vdwg.mxu0
    %v193 = vld [vmem:[#allocation8 + $0x3] sm:$0x1]
    %v194 = vld [vmem:[#allocation8 + $0x4] sm:$0x1]
    %v195 = vrot.slane %v191, 4
    %v196 = vadd.f32 %v191, %v195
    %v197 = vrot.slane %v196, 2
    %v198 = vadd.f32 %v196, %v197
    %v199 = vrot.slane %v198, 1
    %v200 = vadd.f32 %v198, %v199
    %v201 = vmul.f32 %v200, 0.125
    %v202 = vsub.f32 %v191, %v201
    %v203 = vmul.f32 %v202, %v202
    %v204 = vrot.slane %v203, 4
    %v205 = vadd.f32 %v203, %v204
    %v206 = vrot.slane %v205, 2
    %v207 = vadd.f32 %v205, %v206
    %v208 = vrot.slane %v207, 1
    %v209 = vadd.f32 %v207, %v208
    %v210 = vmul.f32 %v209, 0.125
    %v211 = vadd.f32 %v210, 1e-05
    %v212 = vrsqrt.pop %v211
    %v213 = vmul.f32 %v212, %v211
    %v214 = vmul.f32 %v213, %v212
    %v215 = vmul.f32 0.5, %v214
    %v216 = vsub.f32 1.5, %v215
    %v217 = vmul.f32 %v212, %v216
    %vm218 = vweird.f32 %v211
    %vm219 = vweird.f32 %v212
    %vm220 = vmor %vm218, %vm219
    %v221 = vsel %vm220, %v212, %v217
    %v222 = vmul.f32 %v202, %v221
    %v223 = vperm.slane %v193, 0
    %v224 = vmul.f32 %v222, %v223
    %v225 = vperm.slane %v194, 0
    %v226 = vadd.f32 %v224, %v225
    %227 = vst [vmem:[#allocation10] sm:$0xff] %v226
    // Predicated region
    $region34: #{forward.1} parent=1 // pred_check
      _
    $region35: #{forward.1} parent=1 // pred_check_branch
      %229 = sbr.rel (0) target = $region37
    $region36: #{forward.1} parent=1 // pred_region
      %231 = vsyncadd [#allocation4], 0
      %s233 = sshll.u32 [#allocation10], 4
      %s234 = int_to_ptr.vmem [resolvable:$true] %s233
      %s235 = sshll.u32 %s4, 4
      %s236 = int_to_ptr.hbm [resolvable:$true] %s235
      %238 = dma.vmem_to_hbm [thread:$0]  %s234, 128, %s236, [#allocation4]
    $region37: #{forward.1} parent=1 // pred_fallthru
      _
    // Predicated region
    $region38: #{forward.1} parent=1 // pred_check
      _
    $region39: #{forward.1} parent=1 // pred_check_branch
      %240 = sbr.rel (0) target = $region41
    $region40: #{forward.1} parent=1 // pred_region
      %242 = dma.done [#allocation4], 128
    $region41: #{forward.1} parent=1 // pred_fallthru
      _
    %243 = vsyncpa [#allocation3], 1
    %244 = vsyncpa [#allocation6], 1
    %245 = vsyncpa [#allocation9], 1
    %246 = vsyncpa [#allocation4], 1

</llo_original>
